<compile_context>
chip_gen: v7x
topology: tpu7x:2x2x1
jax: 0.10.0
libtpu: 0.0.40
codegen_flags: <defaults>
</compile_context>

<pallas_src>
import jax
import jax.numpy as jnp
from jax.experimental import pallas as pl
from jax.experimental.pallas import tpu as pltpu

_NEG = -1e30  # finite "-inf" sentinel (avoids inf-inf NaNs in the online rescale)


def softmax_aggr_kernel(x_ref, w_ref, bias_ref, temp_ref, gidx_row_ref, gidx_col_ref,
                        out_ref, segmax_ref, segsum_ref, acc_ref):
    ni = pl.program_id(1)           # N-tile index (reduction axis, innermost)

    @pl.when(ni == 0)
    def _init():
        segmax_ref[...] = jnp.full_like(segmax_ref, _NEG)
        segsum_ref[...] = jnp.zeros_like(segsum_ref)
        acc_ref[...] = jnp.zeros_like(acc_ref)

    tile_n = x_ref.shape[0]
    b_pad, tile_h = acc_ref.shape

    # ---- lin -> relu -> scale by learnable temperature --------------------------------
    h = jnp.dot(x_ref[...], w_ref[...], preferred_element_type=jnp.float32) + bias_ref[...]
    h = jnp.maximum(h, 0.0)                              # [tile_n, tile_h]
    alpha = h * temp_ref[...]                            # [tile_n, tile_h]

    gidx_row = gidx_row_ref[...]                         # [1, tile_n] int32
    gidx_col = gidx_col_ref[...]                         # [tile_n, 1] int32

    # One-hot membership built in-kernel (no HBM one-hot traffic).
    m = (jax.lax.broadcasted_iota(jnp.int32, (b_pad, tile_n), 0) == gidx_row
         ).astype(jnp.float32)                           # [B_pad, tile_n]
    mt = (jax.lax.broadcasted_iota(jnp.int32, (tile_n, b_pad), 1) == gidx_col
          ).astype(jnp.float32)                          # [tile_n, B_pad]

    # ---- per-segment max of this tile (bounded loop, no [B,N,H] intermediate) ---------
    row_ids = jax.lax.broadcasted_iota(jnp.int32, (b_pad, 1), 0)

    def seg_max_body(bi, tmax):
        node_mask = gidx_col == bi                                       # [tile_n, 1]
        rmax = jnp.max(jnp.where(node_mask, alpha, _NEG), axis=0, keepdims=True)
        return jnp.where(row_ids == bi, jnp.maximum(tmax, rmax), tmax)

    tile_max = jax.lax.fori_loop(
        0, b_pad, seg_max_body,
        jnp.full((b_pad, tile_h), _NEG, jnp.float32),
        unroll=(b_pad <= 32))

    # ---- online (flash-style) segment softmax update ----------------------------------
    m_old = segmax_ref[...]
    m_new = jnp.maximum(m_old, tile_max)
    segmax_ref[...] = m_new
    rescale = jnp.exp(m_old - m_new)                     # [B_pad, tile_h]

    # Gather each node's running segment max with ONE MXU matmul (one-hot gather).
    node_max = jnp.dot(mt, m_new, preferred_element_type=jnp.float32)    # [tile_n, tile_h]
    exp_a = jnp.exp(alpha - node_max)                                     # [tile_n, tile_h]

    # Segment reductions on the MXU (K = tile_n).
    sum_c = jnp.dot(m, exp_a, preferred_element_type=jnp.float32)         # [B_pad, tile_h]
    acc_c = jnp.dot(m, h * exp_a, preferred_element_type=jnp.float32)     # [B_pad, tile_h]

    segsum_ref[...] = segsum_ref[...] * rescale + sum_c
    acc_ref[...] = acc_ref[...] * rescale + acc_c

    @pl.when(ni == pl.num_programs(1) - 1)
    def _finalize():
        # Normalize on the small [B_pad, tile_h] tile instead of per node.
        out_ref[...] = acc_ref[...] * pl.reciprocal(segsum_ref[...] + 1e-16, approx=False)


def _round_up(a, m):
    return (a + m - 1) // m * m


def softmax_aggr(x, graph_idx, batch_size, w, b, t, *, tile_n_target=1024):
    """Forward pass of SoftmaxAggr. Returns [batch_size, hidden_channels]."""
    N, Cin = x.shape
    H = w.shape[1]

    # Lane-dense output: pad H to a multiple of 128, B to a multiple of 8
    # (with one spare row reserved as a dummy segment for padded nodes).
    H_pad = _round_up(H, 128)
    tile_h = 256 if H_pad % 256 == 0 else 128

    if N <= tile_n_target:
        N_pad = _round_up(N, 8)
        tile_n = N_pad
    else:
        tile_n = tile_n_target                      # multiple of 128
        # Keep the per-step VMEM footprint (x tile + f32 temps, double-buffered) modest.
        while tile_n > 256 and tile_n * (Cin + 6 * tile_h) * 4 > (12 << 20):
            tile_n //= 2
        N_pad = _round_up(N, tile_n)

    B_pad = _round_up(batch_size + 1, 8)

    f32 = jnp.float32
    x_p = jnp.zeros((N_pad, Cin), f32).at[:N, :].set(x.astype(f32))
    w_p = jnp.zeros((Cin, H_pad), f32).at[:, :H].set(w.astype(f32))
    b_p = jnp.zeros((1, H_pad), f32).at[:, :H].set(jnp.reshape(b, (1, H)).astype(f32))
    t_p = jnp.zeros((1, H_pad), f32).at[:, :H].set(jnp.reshape(t, (1, H)).astype(f32))

    # Padded nodes are routed to the dummy segment `batch_size` (sliced off at the end).
    gidx = jnp.full((N_pad,), batch_size, dtype=jnp.int32).at[:N].set(
        graph_idx.astype(jnp.int32))
    gidx_row = gidx.reshape(1, N_pad)
    gidx_col = gidx.reshape(N_pad, 1)

    grid = (H_pad // tile_h, N_pad // tile_n)       # (parallel H blocks, reduction over N)

    agg = pl.pallas_call(
        softmax_aggr_kernel,
        out_shape=jax.ShapeDtypeStruct((B_pad, H_pad), f32),
        grid_spec=pltpu.PrefetchScalarGridSpec(
            num_scalar_prefetch=0,
            grid=grid,
            in_specs=[
                pl.BlockSpec((tile_n, Cin), lambda hi, ni: (ni, 0)),    # x
                pl.BlockSpec((Cin, tile_h), lambda hi, ni: (0, hi)),    # w
                pl.BlockSpec((1, tile_h), lambda hi, ni: (0, hi)),      # bias
                pl.BlockSpec((1, tile_h), lambda hi, ni: (0, hi)),      # temperature
                pl.BlockSpec((1, tile_n), lambda hi, ni: (0, ni)),      # graph_idx (row form)
                pl.BlockSpec((tile_n, 1), lambda hi, ni: (ni, 0)),      # graph_idx (col form)
            ],
            out_specs=pl.BlockSpec((B_pad, tile_h), lambda hi, ni: (0, hi)),
            scratch_shapes=[
                pltpu.VMEM((B_pad, tile_h), f32),    # running segment max
                pltpu.VMEM((B_pad, tile_h), f32),    # running segment exp-sum
                pltpu.VMEM((B_pad, tile_h), f32),    # running numerator
            ],
        ),
        compiler_params=pltpu.CompilerParams(
            dimension_semantics=("parallel", "arbitrary")),
    )(x_p, w_p, b_p, t_p, gidx_row, gidx_col)

    # g_x = agg_x.reshape(batch_size, -1)  (already [B, H] after un-padding)
    # graph_tran = MLP(n_graph_trans=0, out_channels) -> identity for the default config
    return agg[:batch_size, :H]


def reference(x, graph_idx, batch_size, w, b, t):
    """Pure-JAX reference of the same forward (PyG SoftmaxAggregation semantics)."""
    h = jax.nn.relu(x @ w + b)
    alpha = h * t
    seg_max = jax.ops.segment_max(alpha, graph_idx, num_segments=batch_size)
    exp_a = jnp.exp(alpha - seg_max[graph_idx])
    seg_sum = jax.ops.segment_sum(exp_a, graph_idx, num_segments=batch_size)
    soft = exp_a / (seg_sum[graph_idx] + 1e-16)
    return jax.ops.segment_sum(h * soft, graph_idx, num_segments=batch_size)


if __name__ == "__main__":
    B, N, Cin, H = 2, 16, 8, 32   # batch graphs, nodes, in-features, out_channels

    key = jax.random.PRNGKey(0)
    k_x, k_w, k_b = jax.random.split(key, 3)

    x = jax.random.normal(k_x, (N, Cin), dtype=jnp.float32)
    graph_idx = jnp.sort(jnp.arange(N, dtype=jnp.int32) % B)   # nodes -> graph id (sorted)

    # deterministic Linear(-1, H) params (Kaiming-uniform-style bounds)
    bound = 1.0 / (Cin ** 0.5)
    w = jax.random.uniform(k_w, (Cin, H), minval=-bound, maxval=bound, dtype=jnp.float32)
    bias = jax.random.uniform(k_b, (1, H), minval=-bound, maxval=bound, dtype=jnp.float32)
    # SoftmaxAggregation(learn=True, channels=H): temperature t initialized to 1.0
    t = jnp.ones((1, H), dtype=jnp.float32)

    out = softmax_aggr(x, graph_idx, B, w, bias, t)
    out = jax.block_until_ready(out)

    ref = reference(x, graph_idx, B, w, bias, t)
    assert out.shape == (B, H)
    assert jnp.allclose(out, ref, atol=1e-5, rtol=1e-5), (out, ref)
    print("KERNEL_OK")
</pallas_src>

<mosaic_0001>
module attributes {stable_mosaic.version = 11 : i64} {
  func.func @softmax_aggr_kernel(%arg0: i32, %arg1: i32, %arg2: memref<16x8xf32, #tpu.memory_space<vmem>>, %arg3: memref<8x128xf32, #tpu.memory_space<vmem>>, %arg4: memref<1x128xf32, #tpu.memory_space<vmem>>, %arg5: memref<1x128xf32, #tpu.memory_space<vmem>>, %arg6: memref<1x16xi32, #tpu.memory_space<vmem>>, %arg7: memref<16x1xi32, #tpu.memory_space<vmem>>, %arg8: memref<8x128xf32, #tpu.memory_space<vmem>>, %arg9: memref<8x128xf32, #tpu.memory_space<vmem>>, %arg10: memref<8x128xf32, #tpu.memory_space<vmem>>, %arg11: memref<8x128xf32, #tpu.memory_space<vmem>>) attributes {dimension_semantics = [#tpu.dimension_semantics<parallel>, #tpu.dimension_semantics<arbitrary>], iteration_bounds = array<i64: 1, 1>, scalar_prefetch = 0 : i64, scratch_operands = 3 : i64, tpu.core_type = #tpu.core_type<tc>, window_params = [{transform_indices = @transform_0, window_bounds = array<i64: 16, 8>}, {transform_indices = @transform_1, window_bounds = array<i64: 8, 128>}, {transform_indices = @transform_2, window_bounds = array<i64: 1, 128>}, {transform_indices = @transform_3, window_bounds = array<i64: 1, 128>}, {transform_indices = @transform_4, window_bounds = array<i64: 1, 16>}, {transform_indices = @transform_5, window_bounds = array<i64: 16, 1>}, {transform_indices = @transform_6, window_bounds = array<i64: 8, 128>}]} {
    %c0_i32 = arith.constant 0 : i32
    %0 = arith.cmpi eq, %arg1, %c0_i32 : i32
    %1 = arith.extui %0 : i1 to i32
    %c0_i32_0 = arith.constant 0 : i32
    %2 = arith.cmpi ne, %1, %c0_i32_0 : i32
    scf.if %2 {
      %cst_48 = arith.constant -1.000000e+30 : f32
      %170 = vector.broadcast %cst_48 : f32 to vector<8x128xf32>
      %c0_49 = arith.constant 0 : index
      %c0_50 = arith.constant 0 : index
      %171 = vector.load %arg9[%c0_49, %c0_50] : memref<8x128xf32, #tpu.memory_space<vmem>>, vector<8x128xf32>
      tpu.vector_store %arg9[%c0_49, %c0_50], %170 {strides = array<i32>} : memref<8x128xf32, #tpu.memory_space<vmem>>, vector<8x128xf32>,
      %cst_51 = arith.constant 0.000000e+00 : f32
      %172 = vector.broadcast %cst_51 : f32 to vector<8x128xf32>
      %c0_52 = arith.constant 0 : index
      %c0_53 = arith.constant 0 : index
      %173 = vector.load %arg10[%c0_52, %c0_53] : memref<8x128xf32, #tpu.memory_space<vmem>>, vector<8x128xf32>
      tpu.vector_store %arg10[%c0_52, %c0_53], %172 {strides = array<i32>} : memref<8x128xf32, #tpu.memory_space<vmem>>, vector<8x128xf32>,
      %cst_54 = arith.constant 0.000000e+00 : f32
      %174 = vector.broadcast %cst_54 : f32 to vector<8x128xf32>
      %c0_55 = arith.constant 0 : index
      %c0_56 = arith.constant 0 : index
      %175 = vector.load %arg11[%c0_55, %c0_56] : memref<8x128xf32, #tpu.memory_space<vmem>>, vector<8x128xf32>
      tpu.vector_store %arg11[%c0_55, %c0_56], %174 {strides = array<i32>} : memref<8x128xf32, #tpu.memory_space<vmem>>, vector<8x128xf32>,
    } else {
    }
    %c0 = arith.constant 0 : index
    %c0_1 = arith.constant 0 : index
    %3 = vector.load %arg2[%c0, %c0_1] : memref<16x8xf32, #tpu.memory_space<vmem>>, vector<16x8xf32>
    %c0_2 = arith.constant 0 : index
    %c0_3 = arith.constant 0 : index
    %4 = vector.load %arg3[%c0_2, %c0_3] : memref<8x128xf32, #tpu.memory_space<vmem>>, vector<8x128xf32>
    %cst = arith.constant dense<0.000000e+00> : vector<16x128xf32>
    %5 = tpu.matmul %3, %4, %cst {dimension_numbers = #tpu.dot_dimension_numbers<[1], [0], [0], [1], [0, 0, 1, 1], [], []>} : vector<16x8xf32>, vector<8x128xf32>, vector<16x128xf32> -> vector<16x128xf32>
    %c0_4 = arith.constant 0 : index
    %c0_5 = arith.constant 0 : index
    %6 = vector.load %arg4[%c0_4, %c0_5] : memref<1x128xf32, #tpu.memory_space<vmem>>, vector<1x128xf32>
    %7 = vector.broadcast %6 : vector<1x128xf32> to vector<16x128xf32>
    %8 = arith.addf %5, %7 : vector<16x128xf32>
    %cst_6 = arith.constant 0.000000e+00 : f32
    %9 = vector.broadcast %cst_6 : f32 to vector<16x128xf32>
    %10 = arith.maximumf %8, %9 : vector<16x128xf32>
    %c0_7 = arith.constant 0 : index
    %c0_8 = arith.constant 0 : index
    %11 = vector.load %arg5[%c0_7, %c0_8] : memref<1x128xf32, #tpu.memory_space<vmem>>, vector<1x128xf32>
    %12 = vector.broadcast %11 : vector<1x128xf32> to vector<16x128xf32>
    %13 = arith.mulf %10, %12 : vector<16x128xf32>
    %c0_9 = arith.constant 0 : index
    %c0_10 = arith.constant 0 : index
    %14 = vector.load %arg6[%c0_9, %c0_10] : memref<1x16xi32, #tpu.memory_space<vmem>>, vector<1x16xi32>
    %c0_11 = arith.constant 0 : index
    %c0_12 = arith.constant 0 : index
    %15 = vector.load %arg7[%c0_11, %c0_12] : memref<16x1xi32, #tpu.memory_space<vmem>>, vector<16x1xi32>
    %16 = tpu.iota {dimensions = array<i32: 0>} : vector<8x16xi32>
    %17 = vector.broadcast %14 : vector<1x16xi32> to vector<8x16xi32>
    %18 = arith.cmpi eq, %16, %17 : vector<8x16xi32>
    %19 = arith.extui %18 : vector<8x16xi1> to vector<8x16xi32>
    %20 = arith.sitofp %19 : vector<8x16xi32> to vector<8x16xf32>
    %21 = tpu.iota {dimensions = array<i32: 1>} : vector<16x8xi32>
    %22 = vector.broadcast %15 : vector<16x1xi32> to vector<16x8xi32>
    %23 = arith.cmpi eq, %21, %22 : vector<16x8xi32>
    %24 = arith.extui %23 : vector<16x8xi1> to vector<16x8xi32>
    %25 = arith.sitofp %24 : vector<16x8xi32> to vector<16x8xf32>
    %26 = tpu.iota {dimensions = array<i32: 0>} : vector<8x1xi32>
    %cst_13 = arith.constant -1.000000e+30 : f32
    %27 = vector.broadcast %cst_13 : f32 to vector<8x128xf32>
    %c0_i32_14 = arith.constant 0 : i32
    %28 = vector.broadcast %c0_i32_14 : i32 to vector<16x1xi32>
    %29 = arith.cmpi eq, %15, %28 : vector<16x1xi32>
    %cst_15 = arith.constant -1.000000e+30 : f32
    %30 = vector.shape_cast %29 : vector<16x1xi1> to vector<16x1xi1>
    %31 = vector.broadcast %30 : vector<16x1xi1> to vector<16x128xi1>
    %32 = vector.broadcast %cst_15 : f32 to vector<16x128xf32>
    %33 = arith.select %31, %13, %32 : vector<16x128xi1>, vector<16x128xf32>
    %cst_16 = arith.constant dense<0xFF800000> : vector<128xf32>
    %34 = vector.multi_reduction <maximumf>, %33, %cst_16 [0] : vector<16x128xf32> to vector<128xf32>
    %35 = vector.shape_cast %34 : vector<128xf32> to vector<1x128xf32>
    %36 = vector.broadcast %c0_i32_14 : i32 to vector<8x1xi32>
    %37 = arith.cmpi eq, %26, %36 : vector<8x1xi32>
    %38 = vector.broadcast %35 : vector<1x128xf32> to vector<8x128xf32>
    %39 = arith.maximumf %27, %38 : vector<8x128xf32>
    %40 = vector.shape_cast %37 : vector<8x1xi1> to vector<8x1xi1>
    %41 = vector.broadcast %40 : vector<8x1xi1> to vector<8x128xi1>
    %42 = arith.select %41, %39, %27 : vector<8x128xi1>, vector<8x128xf32>
    %c1_i32 = arith.constant 1 : i32
    %43 = vector.broadcast %c1_i32 : i32 to vector<16x1xi32>
    %44 = arith.cmpi eq, %15, %43 : vector<16x1xi32>
    %cst_17 = arith.constant -1.000000e+30 : f32
    %45 = vector.shape_cast %44 : vector<16x1xi1> to vector<16x1xi1>
    %46 = vector.broadcast %45 : vector<16x1xi1> to vector<16x128xi1>
    %47 = vector.broadcast %cst_17 : f32 to vector<16x128xf32>
    %48 = arith.select %46, %13, %47 : vector<16x128xi1>, vector<16x128xf32>
    %cst_18 = arith.constant dense<0xFF800000> : vector<128xf32>
    %49 = vector.multi_reduction <maximumf>, %48, %cst_18 [0] : vector<16x128xf32> to vector<128xf32>
    %50 = vector.shape_cast %49 : vector<128xf32> to vector<1x128xf32>
    %51 = vector.broadcast %c1_i32 : i32 to vector<8x1xi32>
    %52 = arith.cmpi eq, %26, %51 : vector<8x1xi32>
    %53 = vector.broadcast %50 : vector<1x128xf32> to vector<8x128xf32>
    %54 = arith.maximumf %42, %53 : vector<8x128xf32>
    %55 = vector.shape_cast %52 : vector<8x1xi1> to vector<8x1xi1>
    %56 = vector.broadcast %55 : vector<8x1xi1> to vector<8x128xi1>
    %57 = arith.select %56, %54, %42 : vector<8x128xi1>, vector<8x128xf32>
    %c2_i32 = arith.constant 2 : i32
    %58 = vector.broadcast %c2_i32 : i32 to vector<16x1xi32>
    %59 = arith.cmpi eq, %15, %58 : vector<16x1xi32>
    %cst_19 = arith.constant -1.000000e+30 : f32
    %60 = vector.shape_cast %59 : vector<16x1xi1> to vector<16x1xi1>
    %61 = vector.broadcast %60 : vector<16x1xi1> to vector<16x128xi1>
    %62 = vector.broadcast %cst_19 : f32 to vector<16x128xf32>
    %63 = arith.select %61, %13, %62 : vector<16x128xi1>, vector<16x128xf32>
    %cst_20 = arith.constant dense<0xFF800000> : vector<128xf32>
    %64 = vector.multi_reduction <maximumf>, %63, %cst_20 [0] : vector<16x128xf32> to vector<128xf32>
    %65 = vector.shape_cast %64 : vector<128xf32> to vector<1x128xf32>
    %66 = vector.broadcast %c2_i32 : i32 to vector<8x1xi32>
    %67 = arith.cmpi eq, %26, %66 : vector<8x1xi32>
    %68 = vector.broadcast %65 : vector<1x128xf32> to vector<8x128xf32>
    %69 = arith.maximumf %57, %68 : vector<8x128xf32>
    %70 = vector.shape_cast %67 : vector<8x1xi1> to vector<8x1xi1>
    %71 = vector.broadcast %70 : vector<8x1xi1> to vector<8x128xi1>
    %72 = arith.select %71, %69, %57 : vector<8x128xi1>, vector<8x128xf32>
    %c3_i32 = arith.constant 3 : i32
    %73 = vector.broadcast %c3_i32 : i32 to vector<16x1xi32>
    %74 = arith.cmpi eq, %15, %73 : vector<16x1xi32>
    %cst_21 = arith.constant -1.000000e+30 : f32
    %75 = vector.shape_cast %74 : vector<16x1xi1> to vector<16x1xi1>
    %76 = vector.broadcast %75 : vector<16x1xi1> to vector<16x128xi1>
    %77 = vector.broadcast %cst_21 : f32 to vector<16x128xf32>
    %78 = arith.select %76, %13, %77 : vector<16x128xi1>, vector<16x128xf32>
    %cst_22 = arith.constant dense<0xFF800000> : vector<128xf32>
    %79 = vector.multi_reduction <maximumf>, %78, %cst_22 [0] : vector<16x128xf32> to vector<128xf32>
    %80 = vector.shape_cast %79 : vector<128xf32> to vector<1x128xf32>
    %81 = vector.broadcast %c3_i32 : i32 to vector<8x1xi32>
    %82 = arith.cmpi eq, %26, %81 : vector<8x1xi32>
    %83 = vector.broadcast %80 : vector<1x128xf32> to vector<8x128xf32>
    %84 = arith.maximumf %72, %83 : vector<8x128xf32>
    %85 = vector.shape_cast %82 : vector<8x1xi1> to vector<8x1xi1>
    %86 = vector.broadcast %85 : vector<8x1xi1> to vector<8x128xi1>
    %87 = arith.select %86, %84, %72 : vector<8x128xi1>, vector<8x128xf32>
    %c4_i32 = arith.constant 4 : i32
    %88 = vector.broadcast %c4_i32 : i32 to vector<16x1xi32>
    %89 = arith.cmpi eq, %15, %88 : vector<16x1xi32>
    %cst_23 = arith.constant -1.000000e+30 : f32
    %90 = vector.shape_cast %89 : vector<16x1xi1> to vector<16x1xi1>
    %91 = vector.broadcast %90 : vector<16x1xi1> to vector<16x128xi1>
    %92 = vector.broadcast %cst_23 : f32 to vector<16x128xf32>
    %93 = arith.select %91, %13, %92 : vector<16x128xi1>, vector<16x128xf32>
    %cst_24 = arith.constant dense<0xFF800000> : vector<128xf32>
    %94 = vector.multi_reduction <maximumf>, %93, %cst_24 [0] : vector<16x128xf32> to vector<128xf32>
    %95 = vector.shape_cast %94 : vector<128xf32> to vector<1x128xf32>
    %96 = vector.broadcast %c4_i32 : i32 to vector<8x1xi32>
    %97 = arith.cmpi eq, %26, %96 : vector<8x1xi32>
    %98 = vector.broadcast %95 : vector<1x128xf32> to vector<8x128xf32>
    %99 = arith.maximumf %87, %98 : vector<8x128xf32>
    %100 = vector.shape_cast %97 : vector<8x1xi1> to vector<8x1xi1>
    %101 = vector.broadcast %100 : vector<8x1xi1> to vector<8x128xi1>
    %102 = arith.select %101, %99, %87 : vector<8x128xi1>, vector<8x128xf32>
    %c5_i32 = arith.constant 5 : i32
    %103 = vector.broadcast %c5_i32 : i32 to vector<16x1xi32>
    %104 = arith.cmpi eq, %15, %103 : vector<16x1xi32>
    %cst_25 = arith.constant -1.000000e+30 : f32
    %105 = vector.shape_cast %104 : vector<16x1xi1> to vector<16x1xi1>
    %106 = vector.broadcast %105 : vector<16x1xi1> to vector<16x128xi1>
    %107 = vector.broadcast %cst_25 : f32 to vector<16x128xf32>
    %108 = arith.select %106, %13, %107 : vector<16x128xi1>, vector<16x128xf32>
    %cst_26 = arith.constant dense<0xFF800000> : vector<128xf32>
    %109 = vector.multi_reduction <maximumf>, %108, %cst_26 [0] : vector<16x128xf32> to vector<128xf32>
    %110 = vector.shape_cast %109 : vector<128xf32> to vector<1x128xf32>
    %111 = vector.broadcast %c5_i32 : i32 to vector<8x1xi32>
    %112 = arith.cmpi eq, %26, %111 : vector<8x1xi32>
    %113 = vector.broadcast %110 : vector<1x128xf32> to vector<8x128xf32>
    %114 = arith.maximumf %102, %113 : vector<8x128xf32>
    %115 = vector.shape_cast %112 : vector<8x1xi1> to vector<8x1xi1>
    %116 = vector.broadcast %115 : vector<8x1xi1> to vector<8x128xi1>
    %117 = arith.select %116, %114, %102 : vector<8x128xi1>, vector<8x128xf32>
    %c6_i32 = arith.constant 6 : i32
    %118 = vector.broadcast %c6_i32 : i32 to vector<16x1xi32>
    %119 = arith.cmpi eq, %15, %118 : vector<16x1xi32>
    %cst_27 = arith.constant -1.000000e+30 : f32
    %120 = vector.shape_cast %119 : vector<16x1xi1> to vector<16x1xi1>
    %121 = vector.broadcast %120 : vector<16x1xi1> to vector<16x128xi1>
    %122 = vector.broadcast %cst_27 : f32 to vector<16x128xf32>
    %123 = arith.select %121, %13, %122 : vector<16x128xi1>, vector<16x128xf32>
    %cst_28 = arith.constant dense<0xFF800000> : vector<128xf32>
    %124 = vector.multi_reduction <maximumf>, %123, %cst_28 [0] : vector<16x128xf32> to vector<128xf32>
    %125 = vector.shape_cast %124 : vector<128xf32> to vector<1x128xf32>
    %126 = vector.broadcast %c6_i32 : i32 to vector<8x1xi32>
    %127 = arith.cmpi eq, %26, %126 : vector<8x1xi32>
    %128 = vector.broadcast %125 : vector<1x128xf32> to vector<8x128xf32>
    %129 = arith.maximumf %117, %128 : vector<8x128xf32>
    %130 = vector.shape_cast %127 : vector<8x1xi1> to vector<8x1xi1>
    %131 = vector.broadcast %130 : vector<8x1xi1> to vector<8x128xi1>
    %132 = arith.select %131, %129, %117 : vector<8x128xi1>, vector<8x128xf32>
    %c7_i32 = arith.constant 7 : i32
    %133 = vector.broadcast %c7_i32 : i32 to vector<16x1xi32>
    %134 = arith.cmpi eq, %15, %133 : vector<16x1xi32>
    %cst_29 = arith.constant -1.000000e+30 : f32
    %135 = vector.shape_cast %134 : vector<16x1xi1> to vector<16x1xi1>
    %136 = vector.broadcast %135 : vector<16x1xi1> to vector<16x128xi1>
    %137 = vector.broadcast %cst_29 : f32 to vector<16x128xf32>
    %138 = arith.select %136, %13, %137 : vector<16x128xi1>, vector<16x128xf32>
    %cst_30 = arith.constant dense<0xFF800000> : vector<128xf32>
    %139 = vector.multi_reduction <maximumf>, %138, %cst_30 [0] : vector<16x128xf32> to vector<128xf32>
    %140 = vector.shape_cast %139 : vector<128xf32> to vector<1x128xf32>
    %141 = vector.broadcast %c7_i32 : i32 to vector<8x1xi32>
    %142 = arith.cmpi eq, %26, %141 : vector<8x1xi32>
    %143 = vector.broadcast %140 : vector<1x128xf32> to vector<8x128xf32>
    %144 = arith.maximumf %132, %143 : vector<8x128xf32>
    %145 = vector.shape_cast %142 : vector<8x1xi1> to vector<8x1xi1>
    %146 = vector.broadcast %145 : vector<8x1xi1> to vector<8x128xi1>
    %147 = arith.select %146, %144, %132 : vector<8x128xi1>, vector<8x128xf32>
    %c8_i32 = arith.constant 8 : i32
    %c0_31 = arith.constant 0 : index
    %c0_32 = arith.constant 0 : index
    %148 = vector.load %arg9[%c0_31, %c0_32] : memref<8x128xf32, #tpu.memory_space<vmem>>, vector<8x128xf32>
    %149 = arith.maximumf %148, %147 : vector<8x128xf32>
    %c0_33 = arith.constant 0 : index
    %c0_34 = arith.constant 0 : index
    %150 = vector.load %arg9[%c0_33, %c0_34] : memref<8x128xf32, #tpu.memory_space<vmem>>, vector<8x128xf32>
    tpu.vector_store %arg9[%c0_33, %c0_34], %149 {strides = array<i32>} : memref<8x128xf32, #tpu.memory_space<vmem>>, vector<8x128xf32>,
    %151 = arith.subf %148, %149 : vector<8x128xf32>
    %152 = math.exp %151 : vector<8x128xf32>
    %cst_35 = arith.constant dense<0.000000e+00> : vector<16x128xf32>
    %153 = tpu.matmul %25, %149, %cst_35 {dimension_numbers = #tpu.dot_dimension_numbers<[1], [0], [0], [1], [0, 0, 1, 1], [], []>} : vector<16x8xf32>, vector<8x128xf32>, vector<16x128xf32> -> vector<16x128xf32>
    %154 = arith.subf %13, %153 : vector<16x128xf32>
    %155 = math.exp %154 : vector<16x128xf32>
    %cst_36 = arith.constant dense<0.000000e+00> : vector<8x128xf32>
    %156 = tpu.matmul %20, %155, %cst_36 {dimension_numbers = #tpu.dot_dimension_numbers<[1], [0], [0], [1], [0, 0, 1, 1], [], []>} : vector<8x16xf32>, vector<16x128xf32>, vector<8x128xf32> -> vector<8x128xf32>
    %157 = arith.mulf %10, %155 : vector<16x128xf32>
    %cst_37 = arith.constant dense<0.000000e+00> : vector<8x128xf32>
    %158 = tpu.matmul %20, %157, %cst_37 {dimension_numbers = #tpu.dot_dimension_numbers<[1], [0], [0], [1], [0, 0, 1, 1], [], []>} : vector<8x16xf32>, vector<16x128xf32>, vector<8x128xf32> -> vector<8x128xf32>
    %c0_38 = arith.constant 0 : index
    %c0_39 = arith.constant 0 : index
    %159 = vector.load %arg10[%c0_38, %c0_39] : memref<8x128xf32, #tpu.memory_space<vmem>>, vector<8x128xf32>
    %160 = arith.mulf %159, %152 : vector<8x128xf32>
    %161 = arith.addf %160, %156 : vector<8x128xf32>
    %c0_40 = arith.constant 0 : index
    %c0_41 = arith.constant 0 : index
    %162 = vector.load %arg10[%c0_40, %c0_41] : memref<8x128xf32, #tpu.memory_space<vmem>>, vector<8x128xf32>
    tpu.vector_store %arg10[%c0_40, %c0_41], %161 {strides = array<i32>} : memref<8x128xf32, #tpu.memory_space<vmem>>, vector<8x128xf32>,
    %c0_42 = arith.constant 0 : index
    %c0_43 = arith.constant 0 : index
    %163 = vector.load %arg11[%c0_42, %c0_43] : memref<8x128xf32, #tpu.memory_space<vmem>>, vector<8x128xf32>
    %164 = arith.mulf %163, %152 : vector<8x128xf32>
    %165 = arith.addf %164, %158 : vector<8x128xf32>
    %c0_44 = arith.constant 0 : index
    %c0_45 = arith.constant 0 : index
    %166 = vector.load %arg11[%c0_44, %c0_45] : memref<8x128xf32, #tpu.memory_space<vmem>>, vector<8x128xf32>
    tpu.vector_store %arg11[%c0_44, %c0_45], %165 {strides = array<i32>} : memref<8x128xf32, #tpu.memory_space<vmem>>, vector<8x128xf32>,
    %c0_i32_46 = arith.constant 0 : i32
    %167 = arith.cmpi eq, %arg1, %c0_i32_46 : i32
    %168 = arith.extui %167 : i1 to i32
    %c0_i32_47 = arith.constant 0 : i32
    %169 = arith.cmpi ne, %168, %c0_i32_47 : i32
    scf.if %169 {
      %c0_48 = arith.constant 0 : index
      %c0_49 = arith.constant 0 : index
      %170 = vector.load %arg11[%c0_48, %c0_49] : memref<8x128xf32, #tpu.memory_space<vmem>>, vector<8x128xf32>
      %c0_50 = arith.constant 0 : index
      %c0_51 = arith.constant 0 : index
      %171 = vector.load %arg10[%c0_50, %c0_51] : memref<8x128xf32, #tpu.memory_space<vmem>>, vector<8x128xf32>
      %cst_52 = arith.constant 1.000000e-16 : f32
      %172 = vector.broadcast %cst_52 : f32 to vector<8x128xf32>
      %173 = arith.addf %171, %172 : vector<8x128xf32>
      %174 = tpu.reciprocal %173 : vector<8x128xf32> -> vector<8x128xf32>
      %175 = arith.mulf %170, %174 : vector<8x128xf32>
      %c0_53 = arith.constant 0 : index
      %c0_54 = arith.constant 0 : index
      %176 = vector.load %arg8[%c0_53, %c0_54] : memref<8x128xf32, #tpu.memory_space<vmem>>, vector<8x128xf32>
      tpu.vector_store %arg8[%c0_53, %c0_54], %175 {strides = array<i32>} : memref<8x128xf32, #tpu.memory_space<vmem>>, vector<8x128xf32>,
    } else {
    }
    return
  }
  func.func @transform_0(%arg0: i32, %arg1: i32) -> (i32, i32) {
    %c0_i32 = arith.constant 0 : i32
    %c0_i32_0 = arith.constant 0 : i32
    return %arg1, %c0_i32 : i32, i32
  }
  func.func @transform_1(%arg0: i32, %arg1: i32) -> (i32, i32) {
    %c0_i32 = arith.constant 0 : i32
    %c0_i32_0 = arith.constant 0 : i32
    return %c0_i32, %arg0 : i32, i32
  }
  func.func @transform_2(%arg0: i32, %arg1: i32) -> (i32, i32) {
    %c0_i32 = arith.constant 0 : i32
    %c0_i32_0 = arith.constant 0 : i32
    return %c0_i32, %arg0 : i32, i32
  }
  func.func @transform_3(%arg0: i32, %arg1: i32) -> (i32, i32) {
    %c0_i32 = arith.constant 0 : i32
    %c0_i32_0 = arith.constant 0 : i32
    return %c0_i32, %arg0 : i32, i32
  }
  func.func @transform_4(%arg0: i32, %arg1: i32) -> (i32, i32) {
    %c0_i32 = arith.constant 0 : i32
    %c0_i32_0 = arith.constant 0 : i32
    return %c0_i32, %arg1 : i32, i32
  }
  func.func @transform_5(%arg0: i32, %arg1: i32) -> (i32, i32) {
    %c0_i32 = arith.constant 0 : i32
    %c0_i32_0 = arith.constant 0 : i32
    return %arg1, %c0_i32 : i32, i32
  }
  func.func @transform_6(%arg0: i32, %arg1: i32) -> (i32, i32) {
    %c0_i32 = arith.constant 0 : i32
    %c0_i32_0 = arith.constant 0 : i32
    return %c0_i32, %arg0 : i32, i32
  }
}

</mosaic_0001>

<llo_original>
// kernel: tpu_custom_call.1
$region0: #{tpu_custom_call.1}
  #allocation0 [shape = 'u32[]', space=smem, size = 0x4, offset = 0x4, fixed_abs, tag = 'smem constant byte address 0x4 - core index']
  #allocation1 [shape = 'u32[144,128]{1,0:T(1,128)}', space=vmem, size = 0x12000, scoped, tag = 'internal scratch']
  #allocation2 [shape = 'f32[8,128]{1,0:T(8,128)}', space=vmem, size = 0x1000, scoped, tag = 'scratch operand']
  #allocation3 [shape = 'f32[8,128]{1,0:T(8,128)}', space=vmem, size = 0x1000, scoped, tag = 'scratch operand']
  #allocation4 [shape = 'f32[8,128]{1,0:T(8,128)}', space=vmem, size = 0x1000, scoped, tag = 'scratch operand']
  %s0 = inlined_call_operand.vmem [shape: f32[16,8], index: 0, kind: input, shape index: {}]
  %s1 = inlined_call_operand.vmem [shape: f32[8,128], index: 1, kind: input, shape index: {}]
  %s2 = inlined_call_operand.vmem [shape: f32[1,128], index: 2, kind: input, shape index: {}]
  %s3 = inlined_call_operand.vmem [shape: f32[1,128], index: 3, kind: input, shape index: {}]
  %s4 = inlined_call_operand.vmem [shape: s32[1,16], index: 4, kind: input, shape index: {}]
  %s5 = inlined_call_operand.vmem [shape: s32[16,1], index: 5, kind: input, shape index: {}]
  %s6 = inlined_call_operand.hbm [shape: f32[8,128], index: 6, kind: output, shape index: {}]
  %s7 = sld [smem:[#allocation0]]
  $region42: #{tpu_custom_call.1} parent=0
    _
  %s9 = ssub.s32 1, %s7
  %s10 = scalar_select 0, %s9, %s7
  $region1: #{tpu_custom_call.1} parent=0
    #allocation5 [shape = 'u8[4096]{0}', space=vmem, size = 0x1000, scoped, tag = 'output window, operand 0, single buffered']
    #allocation6 [shape = 's32[1]{0}', space=sflag, size = 0x4, scoped, tag = 'scoped memory for tpu_custom_call.1']
    %11 = vsyncpa [#allocation6], 0
    // Predicated region
    $region2: #{tpu_custom_call.1} parent=1 // pred_check
      _
    $region3: #{tpu_custom_call.1} parent=1 // pred_check_branch
      %13 = sbr.rel (0) target = $region5
    $region4: #{tpu_custom_call.1} parent=1 // pred_region
      _
    $region5: #{tpu_custom_call.1} parent=1 // pred_fallthru
      _
    // Predicated region
    $region6: #{tpu_custom_call.1} parent=1 // pred_check
      _
    $region7: #{tpu_custom_call.1} parent=1 // pred_check_branch
      %15 = sbr.rel (0) target = $region9
    $region8: #{tpu_custom_call.1} parent=1 // pred_region
      _
    $region9: #{tpu_custom_call.1} parent=1 // pred_fallthru
      _
    // Predicated region
    $region10: #{tpu_custom_call.1} parent=1 // pred_check
      _
    $region11: #{tpu_custom_call.1} parent=1 // pred_check_branch
      %17 = sbr.rel (0) target = $region13
    $region12: #{tpu_custom_call.1} parent=1 // pred_region
      _
    $region13: #{tpu_custom_call.1} parent=1 // pred_fallthru
      _
    // Predicated region
    $region14: #{tpu_custom_call.1} parent=1 // pred_check
      _
    $region15: #{tpu_custom_call.1} parent=1 // pred_check_branch
      %19 = sbr.rel (0) target = $region17
    $region16: #{tpu_custom_call.1} parent=1 // pred_region
      _
    $region17: #{tpu_custom_call.1} parent=1 // pred_fallthru
      _
    // Predicated region
    $region18: #{tpu_custom_call.1} parent=1 // pred_check
      _
    $region19: #{tpu_custom_call.1} parent=1 // pred_check_branch
      %21 = sbr.rel (0) target = $region21
    $region20: #{tpu_custom_call.1} parent=1 // pred_region
      _
    $region21: #{tpu_custom_call.1} parent=1 // pred_fallthru
      _
    // Predicated region
    $region22: #{tpu_custom_call.1} parent=1 // pred_check
      _
    $region23: #{tpu_custom_call.1} parent=1 // pred_check_branch
      %23 = sbr.rel (0) target = $region25
    $region24: #{tpu_custom_call.1} parent=1 // pred_region
      _
    $region25: #{tpu_custom_call.1} parent=1 // pred_fallthru
      _
    %p24 = scmp.eq.s32.totalorder 0, 0
    // Predicated region
    $region26: #{tpu_custom_call.1} parent=1 // pred_check
      %p25 = pneg %p24
    $region27: #{tpu_custom_call.1} parent=1 // pred_check_branch
      %27 = sbr.rel (%p25) target = $region29
    $region28: #{tpu_custom_call.1} parent=1 // pred_region
      %28 = vst [vmem:[#allocation2] sm:$0xff] -1e+30
      %29 = vst [vmem:[#allocation3] sm:$0xff] 0.0
      %30 = vst [vmem:[#allocation4] sm:$0xff] 0.0
    $region29: #{tpu_custom_call.1} parent=1 // pred_fallthru
      _
    %v31 = vld [vmem:[%s0] sm:$0xff]
    %v32 = vld [vmem:[%s0 + $0x8] sm:$0xff]
    %v33 = vld [vmem:[%s1] sm:$0xff]
    %v34 = vld [vmem:[%s2] sm:$0x1]
    %v36 = vlaneseq
    %v37 = vshrl.u32 %v36, 7
    %v38 = vsub.s32 0, %v37
    %v39 = vrot.slane %v34, %v38
    %vm41 = vcmask 64512
    %v43 = vsel %vm41, %v31, 0
    %v46 = vsel %vm41, %v32, 0
    %48 = vmatprep.subr.mxu0 0.0
    %49 = vmatpush1.msra.mxu0 %v33
    %50 = vmatprep.subr.mxu0 0.0
    %51 = vmatpush1.msra.mxu0 0.0
    %52 = vmatprep.subr.mxu0 0.0
    %53 = vmatpush1.msra.mxu0 0.0
    %54 = vmatprep.subr.mxu0 0.0
    %55 = vmatpush1.msra.mxu0 0.0
    %56 = vmatprep.subr.mxu0 0.0
    %57 = vmatpush1.msra.mxu0 0.0
    %58 = vmatprep.subr.mxu0 0.0
    %59 = vmatpush1.msra.mxu0 0.0
    %60 = vmatprep.subr.mxu0 0.0
    %61 = vmatpush1.msra.mxu0 0.0
    %62 = vmatprep.subr.mxu0 0.0
    %63 = vmatpush1.msra.mxu0 0.0
    %64 = vmatprep.subr.mxu0 0.0
    %65 = vmatpush1.msra.mxu0 0.0
    %66 = vmatprep.subr.mxu0 0.0
    %67 = vmatpush1.msra.mxu0 0.0
    %68 = vmatprep.subr.mxu0 0.0
    %69 = vmatpush1.msra.mxu0 0.0
    %70 = vmatprep.subr.mxu0 0.0
    %71 = vmatpush1.msra.mxu0 0.0
    %72 = vmatprep.subr.mxu0 0.0
    %73 = vmatpush1.msra.mxu0 0.0
    %74 = vmatprep.subr.mxu0 0.0
    %75 = vmatpush1.msra.mxu0 0.0
    %76 = vmatprep.subr.mxu0 0.0
    %77 = vmatpush1.msra.mxu0 0.0
    %78 = vmatprep.subr.mxu0 0.0
    %79 = vmatpush1.msra.mxu0 0.0
    %80 = vmatprep.subr.mxu0 0.0
    %81 = vmatpush1.msra.mxu0 0.0
    %82 = vmatprep.subr.mxu0 0.0
    %83 = vmatpush1.msra.mxu0 0.0
    %84 = vmatprep.subr.mxu0 0.0
    %85 = vmatpush1.msra.mxu0 0.0
    %86 = vmatprep.subr.mxu0 0.0
    %87 = vmatpush1.msra.mxu0 0.0
    %88 = vmatprep.subr.mxu0 0.0
    %89 = vmatpush1.msra.mxu0 0.0
    %90 = vmatprep.subr.mxu0 0.0
    %91 = vmatpush1.msra.mxu0 0.0
    %92 = vmatprep.subr.mxu0 0.0
    %93 = vmatpush1.msra.mxu0 0.0
    %94 = vmatprep.subr.mxu0 0.0
    %95 = vmatpush1.msra.mxu0 0.0
    %96 = vmatprep.subr.mxu0 0.0
    %97 = vmatpush1.msra.mxu0 0.0
    %98 = vmatprep.subr.mxu0 0.0
    %99 = vmatpush1.msra.mxu0 0.0
    %100 = vmatprep.subr.mxu0 0.0
    %101 = vmatpush1.msra.mxu0 0.0
    %102 = vmatprep.subr.mxu0 0.0
    %103 = vmatpush1.msra.mxu0 0.0
    %104 = vmatprep.subr.mxu0 0.0
    %105 = vmatpush1.msra.mxu0 0.0
    %106 = vmatprep.subr.mxu0 0.0
    %107 = vmatpush1.msra.mxu0 0.0
    %108 = vmatprep.subr.mxu0 0.0
    %109 = vmatpush1.msra.mxu0 0.0
    %110 = vmatprep.subr.mxu0 0.0
    %111 = vmatpush1.msra.mxu0 0.0
    %112 = vmatprep.mubr.f32.mxu0 0.0
    %113 = vmatmul.mubr.f32.gmra.mrb[0].mxu0 %v43
    %v114 = vpop.f32.mrb[0].mxu0
    %v115 = vadd.f32 %v39, %v114
    %v116 = vpop.f32.mrb[0].mxu0
    %117 = vmatprep.mubr.f32.mxu0 0.0
    %118 = vmatmul.mubr.f32.gmra.mrb[0].mxu0 %v46
    %v119 = vpop.f32.mrb[0].mxu0
    %v120 = vadd.f32 %v39, %v119
    %v121 = vpop.f32.mrb[0].mxu0
    %122 = vdwg.mxu0
    %v123 = vmax.f32 %v115, 0.0
    %v124 = vmax.f32 %v120, 0.0
    %v125 = vld [vmem:[%s3] sm:$0x1]
    %v127 = vlaneseq
    %v128 = vshrl.u32 %v127, 7
    %v129 = vsub.s32 0, %v128
    %v130 = vrot.slane %v125, %v129
    %v132 = vmul.f32 %v123, %v130
    %v133 = vmul.f32 %v124, %v130
    %v134 = vld [vmem:[%s4] sm:$0x1]
    %v135 = vld [vmem:[%s5] sm:$0xff]
    %v136 = vld [vmem:[%s5 + $0x8] sm:$0xff]
    %v137 = vlaneseq
    %v138 = vshrl.u32 %v137, 7
    %v139 = vlaneseq
    %v140 = vshrl.u32 %v139, 7
    %v141 = vsub.s32 0, %v140
    %v142 = vrot.slane %v134, %v141
    %vm143 = vcmp.eq.s32.totalorder %v138, %v142
    %v144 = vsel %vm143, 1, 0
    %v145 = vcvt.s32.f32 %v144
    %v146 = vlaneseq
    %v147 = vand.u32 %v146, 127
    %148 = vset.pattern.permute.xlu0 0
    %149 = vperm.xlu0 %148, %v135
    %v150 = vpop.permute.xlu0 %149
    %151 = vset.pattern.permute.xlu0 0
    %152 = vperm.xlu0 %151, %v136
    %v153 = vpop.permute.xlu0 %152
    %vm154 = vcmp.eq.s32.totalorder %v147, %v150
    %vm155 = vcmp.eq.s32.totalorder %v147, %v153
    %v156 = vsel %vm154, 1, 0
    %v157 = vsel %vm155, 1, 0
    %v158 = vcvt.s32.f32 %v156
    %v159 = vcvt.s32.f32 %v157
    %vm160 = vcmp.eq.s32.totalorder %v135, 0
    %vm161 = vcmp.eq.s32.totalorder %v136, 0
    %v162 = vsel %vm160, 1, 0
    %v163 = vsel %vm161, 1, 0
    %164 = vset.pattern.permute.xlu0 0
    %165 = vperm.xlu0 %164, %v162
    %v166 = vpop.permute.xlu0 %165
    %167 = vset.pattern.permute.xlu0 0
    %168 = vperm.xlu0 %167, %v163
    %v169 = vpop.permute.xlu0 %168
    %vm170 = vcmp.eq.s32.totalorder %v166, 1
    %vm171 = vcmp.eq.s32.totalorder %v169, 1
    %v172 = vsel %vm170, %v132, -1e+30
    %v173 = vsel %vm171, %v133, -1e+30
    %v174 = vmax.f32 %v172, %v173
    %v175 = vrot.slane %v174, 4
    %v176 = vmax.f32 %v174, %v175
    %v177 = vrot.slane %v176, 2
    %v178 = vmax.f32 %v176, %v177
    %v179 = vrot.slane %v178, 1
    %v180 = vmax.f32 %v178, %v179
    %vm181 = vcmp.eq.s32.totalorder %v138, 0
    %v182 = vmax.f32 %v180, -1e+30
    %v183 = vsel %vm181, 1, 0
    %vm184 = vcmp.eq.s32.totalorder %v183, 1
    %v185 = vsel %vm184, %v182, -1e+30
    %vm186 = vcmp.eq.s32.totalorder %v135, 1
    %vm187 = vcmp.eq.s32.totalorder %v136, 1
    %v188 = vsel %vm186, 1, 0
    %v189 = vsel %vm187, 1, 0
    %190 = vset.pattern.permute.xlu0 0
    %191 = vperm.xlu0 %190, %v188
    %v192 = vpop.permute.xlu0 %191
    %193 = vset.pattern.permute.xlu0 0
    %194 = vperm.xlu0 %193, %v189
    %v195 = vpop.permute.xlu0 %194
    %vm196 = vcmp.eq.s32.totalorder %v192, 1
    %vm197 = vcmp.eq.s32.totalorder %v195, 1
    %v198 = vsel %vm196, %v132, -1e+30
    %v199 = vsel %vm197, %v133, -1e+30
    %v200 = vmax.f32 %v198, %v199
    %v201 = vrot.slane %v200, 4
    %v202 = vmax.f32 %v200, %v201
    %v203 = vrot.slane %v202, 2
    %v204 = vmax.f32 %v202, %v203
    %v205 = vrot.slane %v204, 1
    %v206 = vmax.f32 %v204, %v205
    %vm207 = vcmp.eq.s32.totalorder %v138, 1
    %v208 = vmax.f32 %v185, %v206
    %v209 = vsel %vm207, 1, 0
    %vm210 = vcmp.eq.s32.totalorder %v209, 1
    %v211 = vsel %vm210, %v208, %v185
    %vm212 = vcmp.eq.s32.totalorder %v135, 2
    %vm213 = vcmp.eq.s32.totalorder %v136, 2
    %v214 = vsel %vm212, 1, 0
    %v215 = vsel %vm213, 1, 0
    %216 = vset.pattern.permute.xlu0 0
    %217 = vperm.xlu0 %216, %v214
    %v218 = vpop.permute.xlu0 %217
    %219 = vset.pattern.permute.xlu0 0
    %220 = vperm.xlu0 %219, %v215
    %v221 = vpop.permute.xlu0 %220
    %vm222 = vcmp.eq.s32.totalorder %v218, 1
    %vm223 = vcmp.eq.s32.totalorder %v221, 1
    %v224 = vsel %vm222, %v132, -1e+30
    %v225 = vsel %vm223, %v133, -1e+30
    %v226 = vmax.f32 %v224, %v225
    %v227 = vrot.slane %v226, 4
    %v228 = vmax.f32 %v226, %v227
    %v229 = vrot.slane %v228, 2
    %v230 = vmax.f32 %v228, %v229
    %v231 = vrot.slane %v230, 1
    %v232 = vmax.f32 %v230, %v231
    %vm233 = vcmp.eq.s32.totalorder %v138, 2
    %v234 = vmax.f32 %v211, %v232
    %v235 = vsel %vm233, 1, 0
    %vm236 = vcmp.eq.s32.totalorder %v235, 1
    %v237 = vsel %vm236, %v234, %v211
    %vm238 = vcmp.eq.s32.totalorder %v135, 3
    %vm239 = vcmp.eq.s32.totalorder %v136, 3
    %v240 = vsel %vm238, 1, 0
    %v241 = vsel %vm239, 1, 0
    %242 = vset.pattern.permute.xlu0 0
    %243 = vperm.xlu0 %242, %v240
    %v244 = vpop.permute.xlu0 %243
    %245 = vset.pattern.permute.xlu0 0
    %246 = vperm.xlu0 %245, %v241
    %v247 = vpop.permute.xlu0 %246
    %vm248 = vcmp.eq.s32.totalorder %v244, 1
    %vm249 = vcmp.eq.s32.totalorder %v247, 1
    %v250 = vsel %vm248, %v132, -1e+30
    %v251 = vsel %vm249, %v133, -1e+30
    %v252 = vmax.f32 %v250, %v251
    %v253 = vrot.slane %v252, 4
    %v254 = vmax.f32 %v252, %v253
    %v255 = vrot.slane %v254, 2
    %v256 = vmax.f32 %v254, %v255
    %v257 = vrot.slane %v256, 1
    %v258 = vmax.f32 %v256, %v257
    %vm259 = vcmp.eq.s32.totalorder %v138, 3
    %v260 = vmax.f32 %v237, %v258
    %v261 = vsel %vm259, 1, 0
    %vm262 = vcmp.eq.s32.totalorder %v261, 1
    %v263 = vsel %vm262, %v260, %v237
    %vm264 = vcmp.eq.s32.totalorder %v135, 4
    %vm265 = vcmp.eq.s32.totalorder %v136, 4
    %v266 = vsel %vm264, 1, 0
    %v267 = vsel %vm265, 1, 0
    %268 = vset.pattern.permute.xlu0 0
    %269 = vperm.xlu0 %268, %v266
    %v270 = vpop.permute.xlu0 %269
    %271 = vset.pattern.permute.xlu0 0
    %272 = vperm.xlu0 %271, %v267
    %v273 = vpop.permute.xlu0 %272
    %vm274 = vcmp.eq.s32.totalorder %v270, 1
    %vm275 = vcmp.eq.s32.totalorder %v273, 1
    %v276 = vsel %vm274, %v132, -1e+30
    %v277 = vsel %vm275, %v133, -1e+30
    %v278 = vmax.f32 %v276, %v277
    %v279 = vrot.slane %v278, 4
    %v280 = vmax.f32 %v278, %v279
    %v281 = vrot.slane %v280, 2
    %v282 = vmax.f32 %v280, %v281
    %v283 = vrot.slane %v282, 1
    %v284 = vmax.f32 %v282, %v283
    %vm285 = vcmp.eq.s32.totalorder %v138, 4
    %v286 = vmax.f32 %v263, %v284
    %v287 = vsel %vm285, 1, 0
    %vm288 = vcmp.eq.s32.totalorder %v287, 1
    %v289 = vsel %vm288, %v286, %v263
    %vm290 = vcmp.eq.s32.totalorder %v135, 5
    %vm291 = vcmp.eq.s32.totalorder %v136, 5
    %v292 = vsel %vm290, 1, 0
    %v293 = vsel %vm291, 1, 0
    %294 = vset.pattern.permute.xlu0 0
    %295 = vperm.xlu0 %294, %v292
    %v296 = vpop.permute.xlu0 %295
    %297 = vset.pattern.permute.xlu0 0
    %298 = vperm.xlu0 %297, %v293
    %v299 = vpop.permute.xlu0 %298
    %vm300 = vcmp.eq.s32.totalorder %v296, 1
    %vm301 = vcmp.eq.s32.totalorder %v299, 1
    %v302 = vsel %vm300, %v132, -1e+30
    %v303 = vsel %vm301, %v133, -1e+30
    %v304 = vmax.f32 %v302, %v303
    %v305 = vrot.slane %v304, 4
    %v306 = vmax.f32 %v304, %v305
    %v307 = vrot.slane %v306, 2
    %v308 = vmax.f32 %v306, %v307
    %v309 = vrot.slane %v308, 1
    %v310 = vmax.f32 %v308, %v309
    %vm311 = vcmp.eq.s32.totalorder %v138, 5
    %v312 = vmax.f32 %v289, %v310
    %v313 = vsel %vm311, 1, 0
    %vm314 = vcmp.eq.s32.totalorder %v313, 1
    %v315 = vsel %vm314, %v312, %v289
    %vm316 = vcmp.eq.s32.totalorder %v135, 6
    %vm317 = vcmp.eq.s32.totalorder %v136, 6
    %v318 = vsel %vm316, 1, 0
    %v319 = vsel %vm317, 1, 0
    %320 = vset.pattern.permute.xlu0 0
    %321 = vperm.xlu0 %320, %v318
    %v322 = vpop.permute.xlu0 %321
    %323 = vset.pattern.permute.xlu0 0
    %324 = vperm.xlu0 %323, %v319
    %v325 = vpop.permute.xlu0 %324
    %vm326 = vcmp.eq.s32.totalorder %v322, 1
    %vm327 = vcmp.eq.s32.totalorder %v325, 1
    %v328 = vsel %vm326, %v132, -1e+30
    %v329 = vsel %vm327, %v133, -1e+30
    %v330 = vmax.f32 %v328, %v329
    %v331 = vrot.slane %v330, 4
    %v332 = vmax.f32 %v330, %v331
    %v333 = vrot.slane %v332, 2
    %v334 = vmax.f32 %v332, %v333
    %v335 = vrot.slane %v334, 1
    %v336 = vmax.f32 %v334, %v335
    %vm337 = vcmp.eq.s32.totalorder %v138, 6
    %v338 = vmax.f32 %v315, %v336
    %v339 = vsel %vm337, 1, 0
    %vm340 = vcmp.eq.s32.totalorder %v339, 1
    %v341 = vsel %vm340, %v338, %v315
    %vm342 = vcmp.eq.s32.totalorder %v135, 7
    %vm343 = vcmp.eq.s32.totalorder %v136, 7
    %v344 = vsel %vm342, 1, 0
    %v345 = vsel %vm343, 1, 0
    %346 = vset.pattern.permute.xlu0 0
    %347 = vperm.xlu0 %346, %v344
    %v348 = vpop.permute.xlu0 %347
    %349 = vset.pattern.permute.xlu0 0
    %350 = vperm.xlu0 %349, %v345
    %v351 = vpop.permute.xlu0 %350
    %vm352 = vcmp.eq.s32.totalorder %v348, 1
    %vm353 = vcmp.eq.s32.totalorder %v351, 1
    %v354 = vsel %vm352, %v132, -1e+30
    %v355 = vsel %vm353, %v133, -1e+30
    %v356 = vmax.f32 %v354, %v355
    %v357 = vrot.slane %v356, 4
    %v358 = vmax.f32 %v356, %v357
    %v359 = vrot.slane %v358, 2
    %v360 = vmax.f32 %v358, %v359
    %v361 = vrot.slane %v360, 1
    %v362 = vmax.f32 %v360, %v361
    %vm363 = vcmp.eq.s32.totalorder %v138, 7
    %v364 = vmax.f32 %v341, %v362
    %v365 = vsel %vm363, 1, 0
    %vm366 = vcmp.eq.s32.totalorder %v365, 1
    %v367 = vsel %vm366, %v364, %v341
    %v368 = vld [vmem:[#allocation2] sm:$0xff]
    %v369 = vmax.f32 %v368, %v367
    %370 = vst [vmem:[#allocation2] sm:$0xff] %v369
    %v371 = vsub.f32 %v368, %v369
    %v372 = vmul.f32 %v371, 1.442695
    %v373 = vpow.pop %v372
    %v375 = vsel %vm41, %v158, 0
    %v378 = vsel %vm41, %v159, 0
    %380 = vmatprep.subr.mxu0 0.0
    %381 = vmatpush1.msra.mxu0 %v369
    %382 = vmatprep.subr.mxu0 0.0
    %383 = vmatpush1.msra.mxu0 0.0
    %384 = vmatprep.subr.mxu0 0.0
    %385 = vmatpush1.msra.mxu0 0.0
    %386 = vmatprep.subr.mxu0 0.0
    %387 = vmatpush1.msra.mxu0 0.0
    %388 = vmatprep.subr.mxu0 0.0
    %389 = vmatpush1.msra.mxu0 0.0
    %390 = vmatprep.subr.mxu0 0.0
    %391 = vmatpush1.msra.mxu0 0.0
    %392 = vmatprep.subr.mxu0 0.0
    %393 = vmatpush1.msra.mxu0 0.0
    %394 = vmatprep.subr.mxu0 0.0
    %395 = vmatpush1.msra.mxu0 0.0
    %396 = vmatprep.subr.mxu0 0.0
    %397 = vmatpush1.msra.mxu0 0.0
    %398 = vmatprep.subr.mxu0 0.0
    %399 = vmatpush1.msra.mxu0 0.0
    %400 = vmatprep.subr.mxu0 0.0
    %401 = vmatpush1.msra.mxu0 0.0
    %402 = vmatprep.subr.mxu0 0.0
    %403 = vmatpush1.msra.mxu0 0.0
    %404 = vmatprep.subr.mxu0 0.0
    %405 = vmatpush1.msra.mxu0 0.0
    %406 = vmatprep.subr.mxu0 0.0
    %407 = vmatpush1.msra.mxu0 0.0
    %408 = vmatprep.subr.mxu0 0.0
    %409 = vmatpush1.msra.mxu0 0.0
    %410 = vmatprep.subr.mxu0 0.0
    %411 = vmatpush1.msra.mxu0 0.0
    %412 = vmatprep.subr.mxu0 0.0
    %413 = vmatpush1.msra.mxu0 0.0
    %414 = vmatprep.subr.mxu0 0.0
    %415 = vmatpush1.msra.mxu0 0.0
    %416 = vmatprep.subr.mxu0 0.0
    %417 = vmatpush1.msra.mxu0 0.0
    %418 = vmatprep.subr.mxu0 0.0
    %419 = vmatpush1.msra.mxu0 0.0
    %420 = vmatprep.subr.mxu0 0.0
    %421 = vmatpush1.msra.mxu0 0.0
    %422 = vmatprep.subr.mxu0 0.0
    %423 = vmatpush1.msra.mxu0 0.0
    %424 = vmatprep.subr.mxu0 0.0
    %425 = vmatpush1.msra.mxu0 0.0
    %426 = vmatprep.subr.mxu0 0.0
    %427 = vmatpush1.msra.mxu0 0.0
    %428 = vmatprep.subr.mxu0 0.0
    %429 = vmatpush1.msra.mxu0 0.0
    %430 = vmatprep.subr.mxu0 0.0
    %431 = vmatpush1.msra.mxu0 0.0
    %432 = vmatprep.subr.mxu0 0.0
    %433 = vmatpush1.msra.mxu0 0.0
    %434 = vmatprep.subr.mxu0 0.0
    %435 = vmatpush1.msra.mxu0 0.0
    %436 = vmatprep.subr.mxu0 0.0
    %437 = vmatpush1.msra.mxu0 0.0
    %438 = vmatprep.subr.mxu0 0.0
    %439 = vmatpush1.msra.mxu0 0.0
    %440 = vmatprep.subr.mxu0 0.0
    %441 = vmatpush1.msra.mxu0 0.0
    %442 = vmatprep.subr.mxu0 0.0
    %443 = vmatpush1.msra.mxu0 0.0
    %444 = vmatprep.mubr.f32.mxu0 0.0
    %445 = vmatmul.mubr.f32.gmra.mrb[0].mxu0 %v375
    %v446 = vpop.f32.mrb[0].mxu0
    %v447 = vadd.f32 0.0, %v446
    %v448 = vpop.f32.mrb[0].mxu0
    %449 = vmatprep.mubr.f32.mxu0 0.0
    %450 = vmatmul.mubr.f32.gmra.mrb[0].mxu0 %v378
    %v451 = vpop.f32.mrb[0].mxu0
    %v452 = vadd.f32 0.0, %v451
    %v453 = vpop.f32.mrb[0].mxu0
    %454 = vdwg.mxu0
    %v455 = vsub.f32 %v132, %v447
    %v456 = vsub.f32 %v133, %v452
    %v457 = vmul.f32 %v455, 1.442695
    %v458 = vpow.pop %v457
    %v459 = vmul.f32 %v456, 1.442695
    %v460 = vpow.pop %v459
    %vm461 = vcmask 130048
    %v463 = vsel %vm461, %v145, 0
    %465 = vmatprep.subr.mxu0 0.0
    %466 = vmatpush1.msra.mxu0 %v458
    %467 = vmatprep.subr.mxu0 0.0
    %468 = vmatpush1.msra.mxu0 %v460
    %469 = vmatprep.subr.mxu0 0.0
    %470 = vmatpush1.msra.mxu0 0.0
    %471 = vmatprep.subr.mxu0 0.0
    %472 = vmatpush1.msra.mxu0 0.0
    %473 = vmatprep.subr.mxu0 0.0
    %474 = vmatpush1.msra.mxu0 0.0
    %475 = vmatprep.subr.mxu0 0.0
    %476 = vmatpush1.msra.mxu0 0.0
    %477 = vmatprep.subr.mxu0 0.0
    %478 = vmatpush1.msra.mxu0 0.0
    %479 = vmatprep.subr.mxu0 0.0
    %480 = vmatpush1.msra.mxu0 0.0
    %481 = vmatprep.subr.mxu0 0.0
    %482 = vmatpush1.msra.mxu0 0.0
    %483 = vmatprep.subr.mxu0 0.0
    %484 = vmatpush1.msra.mxu0 0.0
    %485 = vmatprep.subr.mxu0 0.0
    %486 = vmatpush1.msra.mxu0 0.0
    %487 = vmatprep.subr.mxu0 0.0
    %488 = vmatpush1.msra.mxu0 0.0
    %489 = vmatprep.subr.mxu0 0.0
    %490 = vmatpush1.msra.mxu0 0.0
    %491 = vmatprep.subr.mxu0 0.0
    %492 = vmatpush1.msra.mxu0 0.0
    %493 = vmatprep.subr.mxu0 0.0
    %494 = vmatpush1.msra.mxu0 0.0
    %495 = vmatprep.subr.mxu0 0.0
    %496 = vmatpush1.msra.mxu0 0.0
    %497 = vmatprep.subr.mxu0 0.0
    %498 = vmatpush1.msra.mxu0 0.0
    %499 = vmatprep.subr.mxu0 0.0
    %500 = vmatpush1.msra.mxu0 0.0
    %501 = vmatprep.subr.mxu0 0.0
    %502 = vmatpush1.msra.mxu0 0.0
    %503 = vmatprep.subr.mxu0 0.0
    %504 = vmatpush1.msra.mxu0 0.0
    %505 = vmatprep.subr.mxu0 0.0
    %506 = vmatpush1.msra.mxu0 0.0
    %507 = vmatprep.subr.mxu0 0.0
    %508 = vmatpush1.msra.mxu0 0.0
    %509 = vmatprep.subr.mxu0 0.0
    %510 = vmatpush1.msra.mxu0 0.0
    %511 = vmatprep.subr.mxu0 0.0
    %512 = vmatpush1.msra.mxu0 0.0
    %513 = vmatprep.subr.mxu0 0.0
    %514 = vmatpush1.msra.mxu0 0.0
    %515 = vmatprep.subr.mxu0 0.0
    %516 = vmatpush1.msra.mxu0 0.0
    %517 = vmatprep.subr.mxu0 0.0
    %518 = vmatpush1.msra.mxu0 0.0
    %519 = vmatprep.subr.mxu0 0.0
    %520 = vmatpush1.msra.mxu0 0.0
    %521 = vmatprep.subr.mxu0 0.0
    %522 = vmatpush1.msra.mxu0 0.0
    %523 = vmatprep.subr.mxu0 0.0
    %524 = vmatpush1.msra.mxu0 0.0
    %525 = vmatprep.subr.mxu0 0.0
    %526 = vmatpush1.msra.mxu0 0.0
    %527 = vmatprep.subr.mxu0 0.0
    %528 = vmatpush1.msra.mxu0 0.0
    %529 = vmatprep.mubr.f32.mxu0 0.0
    %530 = vmatmul.mubr.f32.gmra.mrb[0].mxu0 %v463
    %v531 = vpop.f32.mrb[0].mxu0
    %v532 = vadd.f32 0.0, %v531
    %v533 = vpop.f32.mrb[0].mxu0
    %534 = vdwg.mxu0
    %v535 = vmul.f32 %v123, %v458
    %v536 = vmul.f32 %v124, %v460
    %537 = vmatprep.subr.mxu0 0.0
    %538 = vmatpush1.msra.mxu0 %v535
    %539 = vmatprep.subr.mxu0 0.0
    %540 = vmatpush1.msra.mxu0 %v536
    %541 = vmatprep.subr.mxu0 0.0
    %542 = vmatpush1.msra.mxu0 0.0
    %543 = vmatprep.subr.mxu0 0.0
    %544 = vmatpush1.msra.mxu0 0.0
    %545 = vmatprep.subr.mxu0 0.0
    %546 = vmatpush1.msra.mxu0 0.0
    %547 = vmatprep.subr.mxu0 0.0
    %548 = vmatpush1.msra.mxu0 0.0
    %549 = vmatprep.subr.mxu0 0.0
    %550 = vmatpush1.msra.mxu0 0.0
    %551 = vmatprep.subr.mxu0 0.0
    %552 = vmatpush1.msra.mxu0 0.0
    %553 = vmatprep.subr.mxu0 0.0
    %554 = vmatpush1.msra.mxu0 0.0
    %555 = vmatprep.subr.mxu0 0.0
    %556 = vmatpush1.msra.mxu0 0.0
    %557 = vmatprep.subr.mxu0 0.0
    %558 = vmatpush1.msra.mxu0 0.0
    %559 = vmatprep.subr.mxu0 0.0
    %560 = vmatpush1.msra.mxu0 0.0
    %561 = vmatprep.subr.mxu0 0.0
    %562 = vmatpush1.msra.mxu0 0.0
    %563 = vmatprep.subr.mxu0 0.0
    %564 = vmatpush1.msra.mxu0 0.0
    %565 = vmatprep.subr.mxu0 0.0
    %566 = vmatpush1.msra.mxu0 0.0
    %567 = vmatprep.subr.mxu0 0.0
    %568 = vmatpush1.msra.mxu0 0.0
    %569 = vmatprep.subr.mxu0 0.0
    %570 = vmatpush1.msra.mxu0 0.0
    %571 = vmatprep.subr.mxu0 0.0
    %572 = vmatpush1.msra.mxu0 0.0
    %573 = vmatprep.subr.mxu0 0.0
    %574 = vmatpush1.msra.mxu0 0.0
    %575 = vmatprep.subr.mxu0 0.0
    %576 = vmatpush1.msra.mxu0 0.0
    %577 = vmatprep.subr.mxu0 0.0
    %578 = vmatpush1.msra.mxu0 0.0
    %579 = vmatprep.subr.mxu0 0.0
    %580 = vmatpush1.msra.mxu0 0.0
    %581 = vmatprep.subr.mxu0 0.0
    %582 = vmatpush1.msra.mxu0 0.0
    %583 = vmatprep.subr.mxu0 0.0
    %584 = vmatpush1.msra.mxu0 0.0
    %585 = vmatprep.subr.mxu0 0.0
    %586 = vmatpush1.msra.mxu0 0.0
    %587 = vmatprep.subr.mxu0 0.0
    %588 = vmatpush1.msra.mxu0 0.0
    %589 = vmatprep.subr.mxu0 0.0
    %590 = vmatpush1.msra.mxu0 0.0
    %591 = vmatprep.subr.mxu0 0.0
    %592 = vmatpush1.msra.mxu0 0.0
    %593 = vmatprep.subr.mxu0 0.0
    %594 = vmatpush1.msra.mxu0 0.0
    %595 = vmatprep.subr.mxu0 0.0
    %596 = vmatpush1.msra.mxu0 0.0
    %597 = vmatprep.subr.mxu0 0.0
    %598 = vmatpush1.msra.mxu0 0.0
    %599 = vmatprep.subr.mxu0 0.0
    %600 = vmatpush1.msra.mxu0 0.0
    %601 = vmatprep.mubr.f32.mxu0 0.0
    %602 = vmatmul.mubr.f32.gmra.mrb[0].mxu0 %v463
    %v603 = vpop.f32.mrb[0].mxu0
    %v604 = vadd.f32 0.0, %v603
    %v605 = vpop.f32.mrb[0].mxu0
    %606 = vdwg.mxu0
    %v607 = vld [vmem:[#allocation3] sm:$0xff]
    %v608 = vmul.f32 %v607, %v373
    %v609 = vadd.f32 %v608, %v532
    %610 = vst [vmem:[#allocation3] sm:$0xff] %v609
    %v611 = vld [vmem:[#allocation4] sm:$0xff]
    %v612 = vmul.f32 %v611, %v373
    %v613 = vadd.f32 %v612, %v604
    %614 = vst [vmem:[#allocation4] sm:$0xff] %v613
    // Predicated region
    $region30: #{tpu_custom_call.1} parent=1 // pred_check
      %p615 = pneg %p24
    $region31: #{tpu_custom_call.1} parent=1 // pred_check_branch
      %617 = sbr.rel (%p615) target = $region33
    $region32: #{tpu_custom_call.1} parent=1 // pred_region
      %v618 = vld [vmem:[#allocation4] sm:$0xff]
      %v619 = vld [vmem:[#allocation3] sm:$0xff]
      %v620 = vadd.f32 %v619, 1e-16
      %v621 = vrcp.pop %v620
      %v622 = vmul.f32 %v618, %v621
      %623 = vst [vmem:[#allocation5] sm:$0xff] %v622
    $region33: #{tpu_custom_call.1} parent=1 // pred_fallthru
      _
    // Predicated region
    $region34: #{tpu_custom_call.1} parent=1 // pred_check
      _
    $region35: #{tpu_custom_call.1} parent=1 // pred_check_branch
      %625 = sbr.rel (0) target = $region37
    $region36: #{tpu_custom_call.1} parent=1 // pred_region
      %s627 = ssub.s32 128, 128
      %628 = vsyncadd [#allocation6], %s627
      %s630 = sshll.u32 [#allocation5], 4
      %s631 = int_to_ptr.vmem [resolvable:$true] %s630
      %633 = dma.vmem_to_hbm [thread:$0]  %s631, 128, %s6, [#allocation6]
    $region37: #{tpu_custom_call.1} parent=1 // pred_fallthru
      _
    // Predicated region
    $region38: #{tpu_custom_call.1} parent=1 // pred_check
      _
    $region39: #{tpu_custom_call.1} parent=1 // pred_check_branch
      %635 = sbr.rel (0) target = $region41
    $region40: #{tpu_custom_call.1} parent=1 // pred_region
      %636 = dma.done [#allocation6], 128
    $region41: #{tpu_custom_call.1} parent=1 // pred_fallthru
      _
    %637 = vsyncpa [#allocation6], 1

</llo_original>
